<compile_context>
chip_gen: v6e
topology: v6e:2x2x1
jax: 0.10.0
libtpu: 0.0.40
codegen_flags: <defaults>
</compile_context>

<pallas_src>
import jax
import jax.numpy as jnp
from jax.experimental import pallas as pl
from jax.experimental.pallas import tpu as pltpu


def _copy_kernel(x_ref, o_ref):
    # Pure tile copy: body is a straight vld/vst, no VPU work (v5e has a
    # single store slot per bundle, so keep it minimal).
    o_ref[...] = x_ref[...]


def _choose_tile_rows(rows: int, cols: int, itemsize: int) -> int:
    """Pick a row-tile that keeps each buffer ~<=4 MiB (safe on v7x's 64 MiB
    VMEM with double-buffered in+out) while staying past the ~512-row
    HBM-roofline knee when possible.  Tile must be a multiple of 8 or equal
    the full row extent to satisfy the (8,128) block rule."""
    if rows <= 8:
        return rows
    target_bytes = 4 * 1024 * 1024
    tr = max(8, target_bytes // max(1, cols * itemsize))
    tr = min(tr, 1024, rows)
    tr = max(8, (tr // 8) * 8)
    if tr >= rows:
        return rows  # full extent — always a legal block shape
    return tr


def squeeze_last_two(x: jax.Array) -> jax.Array:
    """Pallas equivalent of SqueezeLastTwo.forward: view to (B, C)."""
    assert x.ndim >= 2, f"expected >=2 dims, got {x.shape}"
    B, C = x.shape[0], x.shape[1]
    trailing = 1
    for d in x.shape[2:]:
        trailing *= d
    assert trailing == 1, (
        "SqueezeLastTwo expects trailing dims of size 1; got %s" % (x.shape,)
    )

    # Squeeze outside the kernel: pure view, zero cost, and it presents a
    # lane-dense 2-D array to pallas_call.
    x2 = jnp.reshape(x, (B, C))

    itemsize = jnp.dtype(x.dtype).itemsize
    total = B * C

    # Prefer an output last-dim that is a multiple of 128 so stores are
    # unmasked full-lane vst (wrapper-side reshape is layout plumbing only).
    if C % 128 == 0:
        rows, cols = B, C
    elif total % 128 == 0:
        rows, cols = total // 128, 128
    else:
        rows, cols = B, C  # tiny/odd shapes: masked stores, but negligible
    xc = jnp.reshape(x2, (rows, cols))

    tile_r = _choose_tile_rows(rows, cols, itemsize)
    grid = (pl.cdiv(rows, tile_r),)

    out = pl.pallas_call(
        _copy_kernel,
        out_shape=jax.ShapeDtypeStruct((rows, cols), x.dtype),
        grid=grid,
        in_specs=[pl.BlockSpec((tile_r, cols), lambda i: (i, 0))],
        out_specs=pl.BlockSpec((tile_r, cols), lambda i: (i, 0)),
        compiler_params=pltpu.CompilerParams(
            # Row axis is independent work: lets Mosaic shard the mem-bound
            # copy across both TensorCores on v7x; harmless on v5e/v6e.
            dimension_semantics=("parallel",),
        ),
        # Zero-FLOP, bandwidth-only custom call — let XLA overlap it.
        cost_estimate=pl.CostEstimate(
            flops=0, transcendentals=0, bytes_accessed=2 * total * itemsize
        ),
    )(xc)

    return jnp.reshape(out, (B, C))


if __name__ == "__main__":
    key = jax.random.PRNGKey(0)
    # Small shape consistent with the module: batch=2, channels=4, spatial 1x1.
    x = jax.random.normal(key, (2, 4, 1, 1), dtype=jnp.float32)

    y = squeeze_last_two(x)
    jax.block_until_ready(y)

    # Reference check (plain JAX reshape == torch .view semantics here).
    y_ref = x.reshape(x.shape[0], x.shape[1])
    assert y.shape == (2, 4)
    assert y.dtype == x.dtype
    assert jnp.array_equal(y, y_ref)

    print("KERNEL_OK")
</pallas_src>

<mosaic_0001>
module attributes {stable_mosaic.version = 11 : i64} {
  func.func @_copy_kernel(%arg0: i32, %arg1: memref<2x4xf32, #tpu.memory_space<vmem>>, %arg2: memref<2x4xf32, #tpu.memory_space<vmem>>) attributes {dimension_semantics = [#tpu.dimension_semantics<parallel>], iteration_bounds = array<i64: 1>, scalar_prefetch = 0 : i64, scratch_operands = 0 : i64, tpu.core_type = #tpu.core_type<tc>, window_params = [{transform_indices = @transform_0, window_bounds = array<i64: 2, 4>}, {transform_indices = @transform_1, window_bounds = array<i64: 2, 4>}]} {
    %c0 = arith.constant 0 : index
    %c0_0 = arith.constant 0 : index
    %0 = vector.load %arg1[%c0, %c0_0] : memref<2x4xf32, #tpu.memory_space<vmem>>, vector<2x4xf32>
    %c0_1 = arith.constant 0 : index
    %c0_2 = arith.constant 0 : index
    %1 = vector.load %arg2[%c0_1, %c0_2] : memref<2x4xf32, #tpu.memory_space<vmem>>, vector<2x4xf32>
    tpu.vector_store %arg2[%c0_1, %c0_2], %0 {strides = array<i32>} : memref<2x4xf32, #tpu.memory_space<vmem>>, vector<2x4xf32>,
    return
  }
  func.func @transform_0(%arg0: i32) -> (i32, i32) {
    %c0_i32 = arith.constant 0 : i32
    %c0_i32_0 = arith.constant 0 : i32
    return %arg0, %c0_i32 : i32, i32
  }
  func.func @transform_1(%arg0: i32) -> (i32, i32) {
    %c0_i32 = arith.constant 0 : i32
    %c0_i32_0 = arith.constant 0 : i32
    return %arg0, %c0_i32 : i32, i32
  }
}

</mosaic_0001>

<llo_original>
// kernel: tpu_custom_call.1
$region0: #{tpu_custom_call.1}
  #allocation0 [shape = 'u32[]', space=smem, size = 0x4, offset = 0x4, fixed_abs, tag = 'smem constant byte address 0x4 - core index']
  #allocation1 [shape = 'u32[144,128]{1,0:T(1,128)}', space=vmem, size = 0x12000, scoped, tag = 'internal scratch']
  %s0 = inlined_call_operand.hbm [shape: f32[2,4], index: 0, kind: input, shape index: {}]
  %s1 = inlined_call_operand.hbm [shape: f32[2,4], index: 1, kind: output, shape index: {}]
  %s2 = sld [smem:[#allocation0]]
  $region18: #{tpu_custom_call.1} parent=0
    _
  %s4 = ssub.s32 1, %s2
  %s5 = scalar_select 0, %s4, %s2
  $region1: #{tpu_custom_call.1} parent=0
    #allocation2 [shape = 'u8[1024]{0}', space=vmem, size = 0x400, scoped, tag = 'input window, operand 0, single buffered']
    #allocation3 [shape = 's32[1]{0}', space=sflag, size = 0x4, scoped, tag = 'scoped memory for tpu_custom_call.1']
    #allocation4 [shape = 's32[1]{0}', space=sflag, size = 0x4, scoped, tag = 'scoped memory for tpu_custom_call.1']
    #allocation5 [shape = 'u8[1024]{0}', space=vmem, size = 0x400, scoped, tag = 'output window, operand 0, single buffered']
    %6 = vsyncpa [#allocation3], 0
    %7 = vsyncpa [#allocation4], 0
    // Predicated region
    $region2: #{tpu_custom_call.1} parent=1 // pred_check
      _
    $region3: #{tpu_custom_call.1} parent=1 // pred_check_branch
      %9 = sbr.rel (0) target = $region5
    $region4: #{tpu_custom_call.1} parent=1 // pred_region
      %s11 = ssub.s32 32, 32
      %12 = vsyncadd [#allocation3], %s11
      %s14 = sshll.u32 [#allocation2], 4
      %s15 = int_to_ptr.vmem [resolvable:$true] %s14
      %17 = dma.hbm_to_vmem [thread:$0]  %s0, 32, %s15, [#allocation3]
    $region5: #{tpu_custom_call.1} parent=1 // pred_fallthru
      _
    // Predicated region
    $region6: #{tpu_custom_call.1} parent=1 // pred_check
      _
    $region7: #{tpu_custom_call.1} parent=1 // pred_check_branch
      %19 = sbr.rel (0) target = $region9
    $region8: #{tpu_custom_call.1} parent=1 // pred_region
      %20 = dma.done [#allocation3], 32
    $region9: #{tpu_custom_call.1} parent=1 // pred_fallthru
      _
    %v21 = vld [vmem:[#allocation2] sm:$0x3]
    %vm22 = vcmask 25600
    %23 = vst.msk [vmem:[#allocation5] sm:$0x3] %vm22, %v21
    // Predicated region
    $region10: #{tpu_custom_call.1} parent=1 // pred_check
      _
    $region11: #{tpu_custom_call.1} parent=1 // pred_check_branch
      %25 = sbr.rel (0) target = $region13
    $region12: #{tpu_custom_call.1} parent=1 // pred_region
      %s27 = ssub.s32 32, 32
      %28 = vsyncadd [#allocation4], %s27
      %s30 = sshll.u32 [#allocation5], 4
      %s31 = int_to_ptr.vmem [resolvable:$true] %s30
      %33 = dma.vmem_to_hbm [thread:$0]  %s31, 32, %s1, [#allocation4]
    $region13: #{tpu_custom_call.1} parent=1 // pred_fallthru
      _
    // Predicated region
    $region14: #{tpu_custom_call.1} parent=1 // pred_check
      _
    $region15: #{tpu_custom_call.1} parent=1 // pred_check_branch
      %35 = sbr.rel (0) target = $region17
    $region16: #{tpu_custom_call.1} parent=1 // pred_region
      %36 = dma.done [#allocation4], 32
    $region17: #{tpu_custom_call.1} parent=1 // pred_fallthru
      _
    %37 = vsyncpa [#allocation3], 1
    %38 = vsyncpa [#allocation4], 1

</llo_original>
